<compile_context>
chip_gen: v6e
topology: v6e:2x2x1
jax: 0.10.0
libtpu: 0.0.40
codegen_flags: <defaults>
</compile_context>

<pallas_src>
import jax
import jax.numpy as jnp
from jax.experimental import pallas as pl
from jax.experimental.pallas import tpu as pltpu


def _round_up(n, m):
    return ((n + m - 1) // m) * m


def _ffnn_kernel(x_ref, w1_ref, b1_ref, w2_ref, b2_ref, w3_ref, b3_ref, o_ref):
    # x_ref: (D_in, TILE_B)  -- batch on the lane axis.
    x_t = x_ref[...]

    # fc1 + ReLU : (H1, D_in) @ (D_in, TILE_B) -> (H1, TILE_B)   [MXU]
    h1 = jnp.dot(w1_ref[...], x_t, preferred_element_type=jnp.float32)
    h1 = jnp.maximum(h1 + b1_ref[...], 0.0)

    # fc2 + ReLU : (H2, H1) @ (H1, TILE_B) -> (H2, TILE_B)       [MXU]
    h2 = jnp.dot(w2_ref[...], h1, preferred_element_type=jnp.float32)
    h2 = jnp.maximum(h2 + b2_ref[...], 0.0)

    # fc3 (out_dim == 1): keep it off the MXU. w3_ref is (H2, 1); broadcast
    # multiply over lanes (VPU) then reduce over the sublane/feature axis (XLU)
    # -> (1, TILE_B), which is already the lane-dense output layout.
    logits = jnp.sum(h2 * w3_ref[...], axis=0, keepdims=True) + b3_ref[...]

    # sigmoid on the EUP, unmasked lane-major store.
    o_ref[...] = jax.nn.sigmoid(logits).astype(o_ref.dtype)


def ffnn_forward(x, params, *, tile_b=256):
    """x: (B, D_in) float32. params: PyTorch-layout weights/biases.

    w1: (H1, D_in)  b1: (H1, 1)
    w2: (H2, H1)    b2: (H2, 1)
    w3: (1,  H2)    b3: (1, 1)
    Returns torch.squeeze(sigmoid(fc3(...))) equivalent: shape (B,) (scalar if B==1).
    """
    w1, b1, w2, b2, w3, b3 = (params["w1"], params["b1"], params["w2"],
                              params["b2"], params["w3"], params["b3"])
    assert w3.shape[0] == 1, "kernel specialises the output_dim == 1 head"

    B, d_in = x.shape
    h1_dim = w1.shape[0]
    h2_dim = w2.shape[0]

    # Tile the batch on the lane axis; keep tiles a multiple of 128 lanes and
    # small enough that (x tile + intermediates + out tile) x 2 buffers stays
    # far under the v7x 64 MiB VMEM (here it is a few hundred KB at most).
    tile_b = min(tile_b, _round_up(max(B, 1), 128))
    b_pad = _round_up(B, tile_b)
    grid = (pl.cdiv(b_pad, tile_b),)

    # Transpose + zero-pad the batch axis outside the kernel (one-time glue).
    x_t = jnp.zeros((d_in, b_pad), jnp.float32).at[:, :B].set(x.T.astype(jnp.float32))
    w3_col = w3.reshape(h2_dim, 1)  # (H2, 1) column for the broadcast-reduce fc3

    resident = lambda i: (0, 0)  # constant block index -> loaded once, stays in VMEM

    out = pl.pallas_call(
        _ffnn_kernel,
        out_shape=jax.ShapeDtypeStruct((1, b_pad), jnp.float32),
        grid=grid,
        in_specs=[
            pl.BlockSpec((d_in, tile_b), lambda i: (0, i)),     # x tile (batch on lanes)
            pl.BlockSpec((h1_dim, d_in), resident),             # w1
            pl.BlockSpec((h1_dim, 1), resident),                # b1
            pl.BlockSpec((h2_dim, h1_dim), resident),           # w2
            pl.BlockSpec((h2_dim, 1), resident),                # b2
            pl.BlockSpec((h2_dim, 1), resident),                # w3 (as column)
            pl.BlockSpec((1, 1), resident),                     # b3
        ],
        out_specs=pl.BlockSpec((1, tile_b), lambda i: (0, i)),  # lane-dense output row
        compiler_params=pltpu.CompilerParams(
            dimension_semantics=("parallel",),  # shard batch grid across TCs on v7x
        ),
    )(x_t, w1, b1, w2, b2, w3_col, b3)

    # Drop padding; match torch.squeeze semantics (also drops batch if B == 1).
    return jnp.squeeze(out[0, :B])


def init_params(key, input_dim, hidden1, hidden2, output_dim):
    """nn.Linear-style init: U(-1/sqrt(fan_in), 1/sqrt(fan_in)); PyTorch (out, in) layout."""
    ks = jax.random.split(key, 6)

    def linear(kw, kb, fan_in, fan_out):
        bound = 1.0 / (fan_in ** 0.5)
        w = jax.random.uniform(kw, (fan_out, fan_in), jnp.float32, -bound, bound)
        b = jax.random.uniform(kb, (fan_out, 1), jnp.float32, -bound, bound)
        return w, b

    w1, b1 = linear(ks[0], ks[1], input_dim, hidden1)
    w2, b2 = linear(ks[2], ks[3], hidden1, hidden2)
    w3, b3 = linear(ks[4], ks[5], hidden2, output_dim)
    return {"w1": w1, "b1": b1, "w2": w2, "b2": b2, "w3": w3, "b3": b3}


if __name__ == "__main__":
    # Small shapes consistent with the module: hidden_dim_1 = hidden_dim_2 = 100,
    # output_dim = 1; pick input_dim = 16 and a batch that exercises both the
    # batch grid (2 tiles) and the padding path.
    key = jax.random.PRNGKey(0)
    k_x, k_p = jax.random.split(key)

    B, D_IN, H1, H2, D_OUT = 300, 16, 100, 100, 1
    x = jax.random.normal(k_x, (B, D_IN), dtype=jnp.float32)
    params = init_params(k_p, D_IN, H1, H2, D_OUT)

    y = ffnn_forward(x, params)
    y = jax.block_until_ready(y)

    # Pure-JAX reference (same math, PyTorch orientation) — sanity check.
    h1 = jnp.maximum(x @ params["w1"].T + params["b1"][:, 0], 0.0)
    h2 = jnp.maximum(h1 @ params["w2"].T + params["b2"][:, 0], 0.0)
    ref = jnp.squeeze(jax.nn.sigmoid(h2 @ params["w3"].T + params["b3"][:, 0]))

    assert y.shape == (B,), y.shape
    assert jnp.allclose(y, ref, atol=1e-5), float(jnp.max(jnp.abs(y - ref)))

    print("KERNEL_OK")
</pallas_src>

<mosaic_0001>
module attributes {stable_mosaic.version = 11 : i64} {
  func.func @_ffnn_kernel(%arg0: i32, %arg1: memref<16x256xf32, #tpu.memory_space<vmem>>, %arg2: memref<100x16xf32, #tpu.memory_space<vmem>>, %arg3: memref<100x1xf32, #tpu.memory_space<vmem>>, %arg4: memref<100x100xf32, #tpu.memory_space<vmem>>, %arg5: memref<100x1xf32, #tpu.memory_space<vmem>>, %arg6: memref<100x1xf32, #tpu.memory_space<vmem>>, %arg7: memref<1x1xf32, #tpu.memory_space<vmem>>, %arg8: memref<1x256xf32, #tpu.memory_space<vmem>>) attributes {dimension_semantics = [#tpu.dimension_semantics<parallel>], iteration_bounds = array<i64: 2>, scalar_prefetch = 0 : i64, scratch_operands = 0 : i64, tpu.core_type = #tpu.core_type<tc>, window_params = [{transform_indices = @transform_0, window_bounds = array<i64: 16, 256>}, {pipeline_mode = #tpu.pipeline_mode<synchronous>, transform_indices = @transform_1, window_bounds = array<i64: 100, 16>}, {pipeline_mode = #tpu.pipeline_mode<synchronous>, transform_indices = @transform_2, window_bounds = array<i64: 100, 1>}, {pipeline_mode = #tpu.pipeline_mode<synchronous>, transform_indices = @transform_3, window_bounds = array<i64: 100, 100>}, {pipeline_mode = #tpu.pipeline_mode<synchronous>, transform_indices = @transform_4, window_bounds = array<i64: 100, 1>}, {pipeline_mode = #tpu.pipeline_mode<synchronous>, transform_indices = @transform_5, window_bounds = array<i64: 100, 1>}, {pipeline_mode = #tpu.pipeline_mode<synchronous>, transform_indices = @transform_6, window_bounds = array<i64: 1, 1>}, {transform_indices = @transform_7, window_bounds = array<i64: 1, 256>}]} {
    %c0 = arith.constant 0 : index
    %c0_0 = arith.constant 0 : index
    %0 = vector.load %arg1[%c0, %c0_0] : memref<16x256xf32, #tpu.memory_space<vmem>>, vector<16x256xf32>
    %c0_1 = arith.constant 0 : index
    %c0_2 = arith.constant 0 : index
    %1 = vector.load %arg2[%c0_1, %c0_2] : memref<100x16xf32, #tpu.memory_space<vmem>>, vector<100x16xf32>
    %cst = arith.constant dense<0.000000e+00> : vector<100x256xf32>
    %2 = tpu.matmul %1, %0, %cst {dimension_numbers = #tpu.dot_dimension_numbers<[1], [0], [0], [1], [0, 0, 1, 1], [], []>} : vector<100x16xf32>, vector<16x256xf32>, vector<100x256xf32> -> vector<100x256xf32>
    %c0_3 = arith.constant 0 : index
    %c0_4 = arith.constant 0 : index
    %3 = vector.load %arg3[%c0_3, %c0_4] : memref<100x1xf32, #tpu.memory_space<vmem>>, vector<100x1xf32>
    %4 = vector.broadcast %3 : vector<100x1xf32> to vector<100x256xf32>
    %5 = arith.addf %2, %4 : vector<100x256xf32>
    %cst_5 = arith.constant 0.000000e+00 : f32
    %6 = vector.broadcast %cst_5 : f32 to vector<100x256xf32>
    %7 = arith.maximumf %5, %6 : vector<100x256xf32>
    %c0_6 = arith.constant 0 : index
    %c0_7 = arith.constant 0 : index
    %8 = vector.load %arg4[%c0_6, %c0_7] : memref<100x100xf32, #tpu.memory_space<vmem>>, vector<100x100xf32>
    %cst_8 = arith.constant dense<0.000000e+00> : vector<100x256xf32>
    %9 = tpu.matmul %8, %7, %cst_8 {dimension_numbers = #tpu.dot_dimension_numbers<[1], [0], [0], [1], [0, 0, 1, 1], [], []>} : vector<100x100xf32>, vector<100x256xf32>, vector<100x256xf32> -> vector<100x256xf32>
    %c0_9 = arith.constant 0 : index
    %c0_10 = arith.constant 0 : index
    %10 = vector.load %arg5[%c0_9, %c0_10] : memref<100x1xf32, #tpu.memory_space<vmem>>, vector<100x1xf32>
    %11 = vector.broadcast %10 : vector<100x1xf32> to vector<100x256xf32>
    %12 = arith.addf %9, %11 : vector<100x256xf32>
    %cst_11 = arith.constant 0.000000e+00 : f32
    %13 = vector.broadcast %cst_11 : f32 to vector<100x256xf32>
    %14 = arith.maximumf %12, %13 : vector<100x256xf32>
    %c0_12 = arith.constant 0 : index
    %c0_13 = arith.constant 0 : index
    %15 = vector.load %arg6[%c0_12, %c0_13] : memref<100x1xf32, #tpu.memory_space<vmem>>, vector<100x1xf32>
    %16 = vector.broadcast %15 : vector<100x1xf32> to vector<100x256xf32>
    %17 = arith.mulf %14, %16 : vector<100x256xf32>
    %cst_14 = arith.constant dense<0.000000e+00> : vector<256xf32>
    %18 = vector.multi_reduction <add>, %17, %cst_14 [0] : vector<100x256xf32> to vector<256xf32>
    %19 = vector.shape_cast %18 : vector<256xf32> to vector<1x256xf32>
    %c0_15 = arith.constant 0 : index
    %c0_16 = arith.constant 0 : index
    %20 = vector.load %arg7[%c0_15, %c0_16] : memref<1x1xf32, #tpu.memory_space<vmem>>, vector<1x1xf32>
    %21 = vector.broadcast %20 : vector<1x1xf32> to vector<1x256xf32>
    %22 = arith.addf %19, %21 : vector<1x256xf32>
    %23 = arith.negf %22 : vector<1x256xf32>
    %24 = math.exp %23 : vector<1x256xf32>
    %cst_17 = arith.constant 1.000000e+00 : f32
    %25 = vector.broadcast %cst_17 : f32 to vector<1x256xf32>
    %26 = arith.addf %25, %24 : vector<1x256xf32>
    %27 = arith.divf %25, %26 : vector<1x256xf32>
    %c0_18 = arith.constant 0 : index
    %c0_19 = arith.constant 0 : index
    %28 = vector.load %arg8[%c0_18, %c0_19] : memref<1x256xf32, #tpu.memory_space<vmem>>, vector<1x256xf32>
    tpu.vector_store %arg8[%c0_18, %c0_19], %27 {strides = array<i32>} : memref<1x256xf32, #tpu.memory_space<vmem>>, vector<1x256xf32>,
    return
  }
  func.func @transform_0(%arg0: i32) -> (i32, i32) {
    %c0_i32 = arith.constant 0 : i32
    %c0_i32_0 = arith.constant 0 : i32
    return %c0_i32, %arg0 : i32, i32
  }
  func.func @transform_1(%arg0: i32) -> (i32, i32) {
    %c0_i32 = arith.constant 0 : i32
    %c0_i32_0 = arith.constant 0 : i32
    %c0_i32_1 = arith.constant 0 : i32
    return %c0_i32, %c0_i32_0 : i32, i32
  }
  func.func @transform_2(%arg0: i32) -> (i32, i32) {
    %c0_i32 = arith.constant 0 : i32
    %c0_i32_0 = arith.constant 0 : i32
    %c0_i32_1 = arith.constant 0 : i32
    return %c0_i32, %c0_i32_0 : i32, i32
  }
  func.func @transform_3(%arg0: i32) -> (i32, i32) {
    %c0_i32 = arith.constant 0 : i32
    %c0_i32_0 = arith.constant 0 : i32
    %c0_i32_1 = arith.constant 0 : i32
    return %c0_i32, %c0_i32_0 : i32, i32
  }
  func.func @transform_4(%arg0: i32) -> (i32, i32) {
    %c0_i32 = arith.constant 0 : i32
    %c0_i32_0 = arith.constant 0 : i32
    %c0_i32_1 = arith.constant 0 : i32
    return %c0_i32, %c0_i32_0 : i32, i32
  }
  func.func @transform_5(%arg0: i32) -> (i32, i32) {
    %c0_i32 = arith.constant 0 : i32
    %c0_i32_0 = arith.constant 0 : i32
    %c0_i32_1 = arith.constant 0 : i32
    return %c0_i32, %c0_i32_0 : i32, i32
  }
  func.func @transform_6(%arg0: i32) -> (i32, i32) {
    %c0_i32 = arith.constant 0 : i32
    %c0_i32_0 = arith.constant 0 : i32
    %c0_i32_1 = arith.constant 0 : i32
    return %c0_i32, %c0_i32_0 : i32, i32
  }
  func.func @transform_7(%arg0: i32) -> (i32, i32) {
    %c0_i32 = arith.constant 0 : i32
    %c0_i32_0 = arith.constant 0 : i32
    return %c0_i32, %arg0 : i32, i32
  }
}

</mosaic_0001>

<llo_original>
// kernel: tpu_custom_call.1
$region0: #{tpu_custom_call.1}
  #allocation0 [shape = 'u32[]', space=smem, size = 0x4, offset = 0x4, fixed_abs, tag = 'smem constant byte address 0x4 - core index']
  #allocation1 [shape = 'u32[144,128]{1,0:T(1,128)}', space=vmem, size = 0x12000, scoped, tag = 'internal scratch']
  #allocation2 [shape = 'f32[1,1]{1,0:T(1,128)S(1)}', space=vmem, size = 0x200, scoped, tag = 'scoped memory for tpu_custom_call.1']
  %s0 = inlined_call_operand.vmem [shape: f32[16,512], index: 0, kind: input, shape index: {}]
  %s1 = inlined_call_operand.vmem [shape: f32[100,16], index: 1, kind: input, shape index: {}]
  %s2 = inlined_call_operand.vmem [shape: f32[100,1], index: 2, kind: input, shape index: {}]
  %s3 = inlined_call_operand.vmem [shape: f32[100,100], index: 3, kind: input, shape index: {}]
  %s4 = inlined_call_operand.vmem [shape: f32[100,1], index: 4, kind: input, shape index: {}]
  %s5 = inlined_call_operand.vmem [shape: f32[100,1], index: 5, kind: input, shape index: {}]
  %s6 = inlined_call_operand.<no memory space> [shape: f32[1,1], index: 6, kind: input, shape index: {}]
  %s7 = inlined_call_operand.hbm [shape: f32[1,512], index: 7, kind: output, shape index: {}]
  %s8 = sld [smem:[#allocation0]]
  $region84: #{tpu_custom_call.1} parent=0
    _
  %s10 = ssub.s32 1, %s8
  %s11 = scalar_select 0, %s10, %s8
  %v12 = vstv %s6
  %13 = vst [vmem:[#allocation2] sm:$0x1] %v12
  $region1: #{tpu_custom_call.1} parent=0
    #allocation3 [shape = 'u8[32768]{0}', space=vmem, size = 0x8000, scoped, tag = 'input window, operand 0']
    #allocation4 [shape = 'u8[2048]{0}', space=vmem, size = 0x800, scoped, tag = 'output window, operand 0']
    #allocation5 [shape = 's32[2]{0}', space=sflag, size = 0x8, scoped, tag = 'scoped memory for tpu_custom_call.1']
    %14 = vsyncpa [#allocation5], 0
    %s15 = scalar_lea.sflag [#allocation5], 1
    %16 = vsyncpa %s15, 0
    loop: start=0, step=1, limit=4
    $region2: #{tpu_custom_call.1} parent=1 // loop_pre_header
      _
    $region3: #{tpu_custom_call.1} parent=1 // loop_header
      %s18 = sphi 0, %s22
      %p19 = scmp.ge.s32.totalorder %s18, 4
      %s28 = sphi 0, %s30
      %s31 = sphi 0, %s28
      %s32 = sphi 0, %s31
      %s48 = sphi 0, %s32
      %s52 = sphi 0, %s52
      %s54 = sphi 0, %s52
      %s55 = sphi 0, %s54
      %s69 = sphi 0, %s55
      %s73 = sphi 0, %s73
      %s75 = sphi 0, %s73
      %s76 = sphi 0, %s75
      %s90 = sphi 0, %s76
      %s94 = sphi 0, %s94
      %s96 = sphi 0, %s94
      %s97 = sphi 0, %s96
      %s111 = sphi 0, %s97
      %s115 = sphi 0, %s115
      %s117 = sphi 0, %s115
      %s118 = sphi 0, %s117
      %s132 = sphi 0, %s118
      %s136 = sphi 0, %s136
      %s138 = sphi 0, %s136
      %s139 = sphi 0, %s138
      %s153 = sphi 0, %s139
      %s157 = sphi 0, %s157
      %s159 = sphi 0, %s157
      %s160 = sphi 0, %s159
      %s174 = sphi 0, %s160
      %s180 = sphi 0, %s182
      %s183 = sphi 0, %s180
      %s184 = sphi 0, %s183
      %s200 = sphi 0, %s184
    $region4: #{tpu_custom_call.1} parent=1 // loop_header_branch
      %21 = sbr.rel (%p19) target = $region8
    $region5: #{tpu_custom_call.1} parent=1 // loop_body
      %s23 = ssub.s32 %s18, 1
      %s24 = ssub.s32 %s18, 2
      %s25 = sadd.s32 %s18, 1
      %s26 = ssub.s32 %s18, %s25
      %p27 = scmp.eq.s32.totalorder %s26, 0
      %s29 = sadd.s32 %s28, 1
      %s30 = scalar_select %p27, %s28, %s29
      %p33 = pneg %p27
      %p34 = scmp.eq.s32.totalorder %s18, 1
      %p35 = por %p33, %p34
      %p36 = scmp.ne.s32.totalorder %s28, %s31
      %p37 = scmp.eq.s32.totalorder %s18, 0
      %p38 = por %p36, %p37
      %p39 = scmp.ne.s32.totalorder %s28, %s31
      %p40 = scmp.eq.s32.totalorder %s23, 1
      %p41 = por %p39, %p40
      %p42 = scmp.ne.s32.totalorder %s31, %s32
      %p43 = scmp.eq.s32.totalorder %s23, 0
      %p44 = por %p42, %p43
      %p45 = scmp.ne.s32.totalorder %s31, %s32
      %p46 = scmp.eq.s32.totalorder %s24, 1
      %p47 = por %p45, %p46
      %p49 = scmp.ne.s32.totalorder %s32, %s48
      %p50 = scmp.eq.s32.totalorder %s24, 0
      %p51 = por %p49, %p50
      %s53 = sadd.s32 %s52, 1
      %p56 = scmp.eq.s32.totalorder %s18, 1
      %p57 = scmp.ne.s32.totalorder %s52, %s54
      %p58 = scmp.eq.s32.totalorder %s18, 0
      %p59 = por %p57, %p58
      %p60 = scmp.ne.s32.totalorder %s52, %s54
      %p61 = scmp.eq.s32.totalorder %s23, 1
      %p62 = por %p60, %p61
      %p63 = scmp.ne.s32.totalorder %s54, %s55
      %p64 = scmp.eq.s32.totalorder %s23, 0
      %p65 = por %p63, %p64
      %p66 = scmp.ne.s32.totalorder %s54, %s55
      %p67 = scmp.eq.s32.totalorder %s24, 1
      %p68 = por %p66, %p67
      %p70 = scmp.ne.s32.totalorder %s55, %s69
      %p71 = scmp.eq.s32.totalorder %s24, 0
      %p72 = por %p70, %p71
      %s74 = sadd.s32 %s73, 1
      %p77 = scmp.eq.s32.totalorder %s18, 1
      %p78 = scmp.ne.s32.totalorder %s73, %s75
      %p79 = scmp.eq.s32.totalorder %s18, 0
      %p80 = por %p78, %p79
      %p81 = scmp.ne.s32.totalorder %s73, %s75
      %p82 = scmp.eq.s32.totalorder %s23, 1
      %p83 = por %p81, %p82
      %p84 = scmp.ne.s32.totalorder %s75, %s76
      %p85 = scmp.eq.s32.totalorder %s23, 0
      %p86 = por %p84, %p85
      %p87 = scmp.ne.s32.totalorder %s75, %s76
      %p88 = scmp.eq.s32.totalorder %s24, 1
      %p89 = por %p87, %p88
      %p91 = scmp.ne.s32.totalorder %s76, %s90
      %p92 = scmp.eq.s32.totalorder %s24, 0
      %p93 = por %p91, %p92
      %s95 = sadd.s32 %s94, 1
      %p98 = scmp.eq.s32.totalorder %s18, 1
      %p99 = scmp.ne.s32.totalorder %s94, %s96
      %p100 = scmp.eq.s32.totalorder %s18, 0
      %p101 = por %p99, %p100
      %p102 = scmp.ne.s32.totalorder %s94, %s96
      %p103 = scmp.eq.s32.totalorder %s23, 1
      %p104 = por %p102, %p103
      %p105 = scmp.ne.s32.totalorder %s96, %s97
      %p106 = scmp.eq.s32.totalorder %s23, 0
      %p107 = por %p105, %p106
      %p108 = scmp.ne.s32.totalorder %s96, %s97
      %p109 = scmp.eq.s32.totalorder %s24, 1
      %p110 = por %p108, %p109
      %p112 = scmp.ne.s32.totalorder %s97, %s111
      %p113 = scmp.eq.s32.totalorder %s24, 0
      %p114 = por %p112, %p113
      %s116 = sadd.s32 %s115, 1
      %p119 = scmp.eq.s32.totalorder %s18, 1
      %p120 = scmp.ne.s32.totalorder %s115, %s117
      %p121 = scmp.eq.s32.totalorder %s18, 0
      %p122 = por %p120, %p121
      %p123 = scmp.ne.s32.totalorder %s115, %s117
      %p124 = scmp.eq.s32.totalorder %s23, 1
      %p125 = por %p123, %p124
      %p126 = scmp.ne.s32.totalorder %s117, %s118
      %p127 = scmp.eq.s32.totalorder %s23, 0
      %p128 = por %p126, %p127
      %p129 = scmp.ne.s32.totalorder %s117, %s118
      %p130 = scmp.eq.s32.totalorder %s24, 1
      %p131 = por %p129, %p130
      %p133 = scmp.ne.s32.totalorder %s118, %s132
      %p134 = scmp.eq.s32.totalorder %s24, 0
      %p135 = por %p133, %p134
      %s137 = sadd.s32 %s136, 1
      %p140 = scmp.eq.s32.totalorder %s18, 1
      %p141 = scmp.ne.s32.totalorder %s136, %s138
      %p142 = scmp.eq.s32.totalorder %s18, 0
      %p143 = por %p141, %p142
      %p144 = scmp.ne.s32.totalorder %s136, %s138
      %p145 = scmp.eq.s32.totalorder %s23, 1
      %p146 = por %p144, %p145
      %p147 = scmp.ne.s32.totalorder %s138, %s139
      %p148 = scmp.eq.s32.totalorder %s23, 0
      %p149 = por %p147, %p148
      %p150 = scmp.ne.s32.totalorder %s138, %s139
      %p151 = scmp.eq.s32.totalorder %s24, 1
      %p152 = por %p150, %p151
      %p154 = scmp.ne.s32.totalorder %s139, %s153
      %p155 = scmp.eq.s32.totalorder %s24, 0
      %p156 = por %p154, %p155
      %s158 = sadd.s32 %s157, 1
      %p161 = scmp.eq.s32.totalorder %s18, 1
      %p162 = scmp.ne.s32.totalorder %s157, %s159
      %p163 = scmp.eq.s32.totalorder %s18, 0
      %p164 = por %p162, %p163
      %p165 = scmp.ne.s32.totalorder %s157, %s159
      %p166 = scmp.eq.s32.totalorder %s23, 1
      %p167 = por %p165, %p166
      %p168 = scmp.ne.s32.totalorder %s159, %s160
      %p169 = scmp.eq.s32.totalorder %s23, 0
      %p170 = por %p168, %p169
      %p171 = scmp.ne.s32.totalorder %s159, %s160
      %p172 = scmp.eq.s32.totalorder %s24, 1
      %p173 = por %p171, %p172
      %p175 = scmp.ne.s32.totalorder %s160, %s174
      %p176 = scmp.eq.s32.totalorder %s24, 0
      %p177 = por %p175, %p176
      %s178 = ssub.s32 %s18, %s25
      %p179 = scmp.eq.s32.totalorder %s178, 0
      %s181 = sadd.s32 %s180, 1
      %s182 = scalar_select %p179, %s180, %s181
      %p185 = pneg %p179
      %p186 = scmp.eq.s32.totalorder %s18, 1
      %p187 = por %p185, %p186
      %p188 = scmp.ne.s32.totalorder %s180, %s183
      %p189 = scmp.eq.s32.totalorder %s18, 0
      %p190 = por %p188, %p189
      %p191 = scmp.ne.s32.totalorder %s180, %s183
      %p192 = scmp.eq.s32.totalorder %s23, 1
      %p193 = por %p191, %p192
      %p194 = scmp.ne.s32.totalorder %s183, %s184
      %p195 = scmp.eq.s32.totalorder %s23, 0
      %p196 = por %p194, %p195
      %p197 = scmp.ne.s32.totalorder %s183, %s184
      %p198 = scmp.eq.s32.totalorder %s24, 1
      %p199 = por %p197, %p198
      %p201 = scmp.ne.s32.totalorder %s184, %s200
      %p202 = scmp.eq.s32.totalorder %s24, 0
      %p203 = por %p201, %p202
      %p204 = scmp.le.s32.totalorder 1, %s18
      %p205 = scmp.lt.s32.totalorder %s18, 3
      %p206 = pnand %p204, %p205
      %p207 = pneg %p206
      // Predicated region
      $region9: #{tpu_custom_call.1} parent=5 // pred_check
        _
      $region10: #{tpu_custom_call.1} parent=5 // pred_check_branch
        %209 = sbr.rel (%p206) target = $region12
      $region11: #{tpu_custom_call.1} parent=5 // pred_region
        %s210 = ssub.s32 %s18, 1
        // Predicated region
        $region13: #{tpu_custom_call.1} parent=11 // pred_check
          %p211 = pneg %p65
        $region14: #{tpu_custom_call.1} parent=11 // pred_check_branch
          %213 = sbr.rel (%p211) target = $region16
        $region15: #{tpu_custom_call.1} parent=11 // pred_region
          _
        $region16: #{tpu_custom_call.1} parent=11 // pred_fallthru
          _
        // Predicated region
        $region17: #{tpu_custom_call.1} parent=11 // pred_check
          %p214 = pneg %p86
        $region18: #{tpu_custom_call.1} parent=11 // pred_check_branch
          %216 = sbr.rel (%p214) target = $region20
        $region19: #{tpu_custom_call.1} parent=11 // pred_region
          _
        $region20: #{tpu_custom_call.1} parent=11 // pred_fallthru
          _
        // Predicated region
        $region21: #{tpu_custom_call.1} parent=11 // pred_check
          %p217 = pneg %p107
        $region22: #{tpu_custom_call.1} parent=11 // pred_check_branch
          %219 = sbr.rel (%p217) target = $region24
        $region23: #{tpu_custom_call.1} parent=11 // pred_region
          _
        $region24: #{tpu_custom_call.1} parent=11 // pred_fallthru
          _
        // Predicated region
        $region25: #{tpu_custom_call.1} parent=11 // pred_check
          %p220 = pneg %p128
        $region26: #{tpu_custom_call.1} parent=11 // pred_check_branch
          %222 = sbr.rel (%p220) target = $region28
        $region27: #{tpu_custom_call.1} parent=11 // pred_region
          _
        $region28: #{tpu_custom_call.1} parent=11 // pred_fallthru
          _
        // Predicated region
        $region29: #{tpu_custom_call.1} parent=11 // pred_check
          %p223 = pneg %p149
        $region30: #{tpu_custom_call.1} parent=11 // pred_check_branch
          %225 = sbr.rel (%p223) target = $region32
        $region31: #{tpu_custom_call.1} parent=11 // pred_region
          _
        $region32: #{tpu_custom_call.1} parent=11 // pred_fallthru
          _
        // Predicated region
        $region33: #{tpu_custom_call.1} parent=11 // pred_check
          %p226 = pneg %p170
        $region34: #{tpu_custom_call.1} parent=11 // pred_check_branch
          %228 = sbr.rel (%p226) target = $region36
        $region35: #{tpu_custom_call.1} parent=11 // pred_region
          _
        $region36: #{tpu_custom_call.1} parent=11 // pred_fallthru
          _
      $region12: #{tpu_custom_call.1} parent=5 // pred_fallthru
        _
      %p229 = scmp.lt.s32.totalorder %s18, 2
      // Predicated region
      $region37: #{tpu_custom_call.1} parent=5 // pred_check
        %p230 = pneg %p229
      $region38: #{tpu_custom_call.1} parent=5 // pred_check_branch
        %232 = sbr.rel (%p230) target = $region40
      $region39: #{tpu_custom_call.1} parent=5 // pred_region
        // Predicated region
        $region41: #{tpu_custom_call.1} parent=39 // pred_check
          %p233 = pneg %p38
        $region42: #{tpu_custom_call.1} parent=39 // pred_check_branch
          %235 = sbr.rel (%p233) target = $region44
        $region43: #{tpu_custom_call.1} parent=39 // pred_region
          %s236 = sand.u32 %s28, 1
          %s237 = sand.u32 %s28, 1
          %s238 = smul.addr %s237, 32
          %s239 = scalar_lea.vmem [#allocation3], %s238
          %s240 = smul.u32 2, %s18
          %s241 = smul.addr %s240, 8
          %s242 = scalar_lea.vmem %s0, %s241
          // Predicated region
          $region45: #{tpu_custom_call.1} parent=43 // pred_check
            _
          $region46: #{tpu_custom_call.1} parent=43 // pred_check_branch
            %244 = sbr.rel (0) target = $region48
          $region47: #{tpu_custom_call.1} parent=43 // pred_region
            // Predicated region
            $region49: #{tpu_custom_call.1} parent=47 // pred_check
              _
            $region50: #{tpu_custom_call.1} parent=47 // pred_check_branch
              %246 = sbr.rel (0) target = $region52
            $region51: #{tpu_custom_call.1} parent=47 // pred_region
              loop: start=0, step=1, limit=1
              $region53: #{tpu_custom_call.1} parent=51 // loop_pre_header
                _
              $region54: #{tpu_custom_call.1} parent=51 // loop_header
                %s248 = sphi 0, %s252
                %p249 = scmp.ge.s32.totalorder %s248, 1
                %s253 = sphi %s242, %s242
                %s254 = sphi %s239, %s239
              $region55: #{tpu_custom_call.1} parent=51 // loop_header_branch
                %251 = sbr.rel (%p249) target = $region59
              $region56: #{tpu_custom_call.1} parent=51 // loop_body
                %v255 = vld [vmem:[%s253] sm:$0xff]
                %256 = vst [vmem:[%s254] sm:$0xff] %v255
                %v257 = vld [vmem:[%s253 + $0x8] sm:$0xff]
                %258 = vst [vmem:[%s254 + $0x8] sm:$0xff] %v257
                %v259 = vld [vmem:[%s253 + $0x20] sm:$0xff]
                %260 = vst [vmem:[%s254 + $0x10] sm:$0xff] %v259
                %v261 = vld [vmem:[%s253 + $0x28] sm:$0xff]
                %262 = vst [vmem:[%s254 + $0x18] sm:$0xff] %v261
              $region57: #{tpu_custom_call.1} parent=51 // loop_footer
                %s252 = sadd.s32 1, %s248
              $region58: #{tpu_custom_call.1} parent=51 // loop_footer_branch
                %247 = sbr.rel target = $region54
              $region59: #{tpu_custom_call.1} parent=51 // loop_exit
                _
            $region52: #{tpu_custom_call.1} parent=47 // pred_fallthru
              _
            // Predicated region
            $region60: #{tpu_custom_call.1} parent=47 // pred_check
              _
            $region61: #{tpu_custom_call.1} parent=47 // pred_check_branch
              %264 = sbr.rel target = $region63
            $region62: #{tpu_custom_call.1} parent=47 // pred_region
              _
            $region63: #{tpu_custom_call.1} parent=47 // pred_fallthru
              _
          $region48: #{tpu_custom_call.1} parent=43 // pred_fallthru
            _
          %265 = vnop
        $region44: #{tpu_custom_call.1} parent=39 // pred_fallthru
          _
      $region40: #{tpu_custom_call.1} parent=5 // pred_fallthru
        _
      %p266 = scmp.le.s32.totalorder 1, %s18
      %p267 = scmp.lt.s32.totalorder %s18, 3
      %p268 = pnand %p266, %p267
      %p269 = pneg %p268
      // Predicated region
      $region64: #{tpu_custom_call.1} parent=5 // pred_check
        _
      $region65: #{tpu_custom_call.1} parent=5 // pred_check_branch
        %271 = sbr.rel (%p268) target = $region67
      $region66: #{tpu_custom_call.1} parent=5 // pred_region
        %s272 = ssub.s32 %s18, 1
        %s273 = sand.u32 %s31, 1
        %s274 = sand.u32 %s31, 1
        %s275 = smul.addr %s274, 32
        %s276 = scalar_lea.vmem [#allocation3], %s275
        // Predicated region
        $region68: #{tpu_custom_call.1} parent=66 // pred_check
          %p277 = pneg %p44
        $region69: #{tpu_custom_call.1} parent=66 // pred_check_branch
          %279 = sbr.rel (%p277) target = $region71
        $region70: #{tpu_custom_call.1} parent=66 // pred_region
          _
        $region71: #{tpu_custom_call.1} parent=66 // pred_fallthru
          _
        %s280 = sand.u32 %s31, 1
        %s281 = sand.u32 %s31, 1
        %s282 = smul.addr %s281, 32
        %s283 = scalar_lea.vmem [#allocation3], %s282
        %p284 = pneg %p44
        %p285 = pneg %p41
        %p286 = pneg %p65
        %p287 = pneg %p62
        %p288 = pneg %p86
        %p289 = pneg %p83
        %p290 = pneg %p107
        %p291 = pneg %p104
        %p292 = pneg %p128
        %p293 = pneg %p125
        %p294 = pneg %p149
        %p295 = pneg %p146
        %p296 = pneg %p170
        %p297 = pneg %p167
        %p298 = pneg %p196
        %p299 = pneg %p193
        %s300 = sand.u32 %s183, 1
        %s301 = scalar_lea.sflag [#allocation5], %s300
        %s302 = sand.u32 %s183, 1
        %s303 = smul.addr %s302, 2
        %s304 = scalar_lea.vmem [#allocation4], %s303
        %s305 = smul.u32 2, %s23
        %s306 = smul.u32 2, %s23
        %v307 = vld [vmem:[%s276] sm:$0xff]
        %v308 = vld [vmem:[%s276 + $0x8] sm:$0xff]
        %v309 = vld [vmem:[%s276 + $0x10] sm:$0xff]
        %v310 = vld [vmem:[%s276 + $0x18] sm:$0xff]
        %v311 = vld [vmem:[%s1] sm:$0xff]
        %v312 = vld [vmem:[%s1 + $0x8] sm:$0xff]
        %v313 = vld [vmem:[%s1 + $0x10] sm:$0xff]
        %v314 = vld [vmem:[%s1 + $0x18] sm:$0xff]
        %v315 = vld [vmem:[%s1 + $0x20] sm:$0xff]
        %v316 = vld [vmem:[%s1 + $0x28] sm:$0xff]
        %v317 = vld [vmem:[%s1 + $0x30] sm:$0xff]
        %v318 = vld [vmem:[%s1 + $0x38] sm:$0xff]
        %v319 = vld [vmem:[%s1 + $0x40] sm:$0xff]
        %v320 = vld [vmem:[%s1 + $0x48] sm:$0xff]
        %v321 = vld [vmem:[%s1 + $0x50] sm:$0xff]
        %v322 = vld [vmem:[%s1 + $0x58] sm:$0xff]
        %v323 = vld [vmem:[%s1 + $0x60] sm:$0xf]
        %v324 = vld [vmem:[%s2] sm:$0xff]
        %v325 = vld [vmem:[%s2 + $0x8] sm:$0xff]
        %v326 = vld [vmem:[%s2 + $0x10] sm:$0xff]
        %v327 = vld [vmem:[%s2 + $0x18] sm:$0xff]
        %v328 = vld [vmem:[%s2 + $0x20] sm:$0xff]
        %v329 = vld [vmem:[%s2 + $0x28] sm:$0xff]
        %v330 = vld [vmem:[%s2 + $0x30] sm:$0xff]
        %v331 = vld [vmem:[%s2 + $0x38] sm:$0xff]
        %v332 = vld [vmem:[%s2 + $0x40] sm:$0xff]
        %v333 = vld [vmem:[%s2 + $0x48] sm:$0xff]
        %v334 = vld [vmem:[%s2 + $0x50] sm:$0xff]
        %v335 = vld [vmem:[%s2 + $0x58] sm:$0xff]
        %v336 = vld [vmem:[%s2 + $0x60] sm:$0xf]
        %338 = vset.pattern.permute.xlu0 0
        %339 = vperm.xlu0 %338, %v324
        %v340 = vpop.permute.xlu0 %339
        %343 = vset.pattern.permute.xlu0 0
        %344 = vperm.xlu0 %343, %v325
        %v345 = vpop.permute.xlu0 %344
        %348 = vset.pattern.permute.xlu0 0
        %349 = vperm.xlu0 %348, %v326
        %v350 = vpop.permute.xlu0 %349
        %353 = vset.pattern.permute.xlu0 0
        %354 = vperm.xlu0 %353, %v327
        %v355 = vpop.permute.xlu0 %354
        %358 = vset.pattern.permute.xlu0 0
        %359 = vperm.xlu0 %358, %v328
        %v360 = vpop.permute.xlu0 %359
        %363 = vset.pattern.permute.xlu0 0
        %364 = vperm.xlu0 %363, %v329
        %v365 = vpop.permute.xlu0 %364
        %368 = vset.pattern.permute.xlu0 0
        %369 = vperm.xlu0 %368, %v330
        %v370 = vpop.permute.xlu0 %369
        %373 = vset.pattern.permute.xlu0 0
        %374 = vperm.xlu0 %373, %v331
        %v375 = vpop.permute.xlu0 %374
        %378 = vset.pattern.permute.xlu0 0
        %379 = vperm.xlu0 %378, %v332
        %v380 = vpop.permute.xlu0 %379
        %383 = vset.pattern.permute.xlu0 0
        %384 = vperm.xlu0 %383, %v333
        %v385 = vpop.permute.xlu0 %384
        %388 = vset.pattern.permute.xlu0 0
        %389 = vperm.xlu0 %388, %v334
        %v390 = vpop.permute.xlu0 %389
        %393 = vset.pattern.permute.xlu0 0
        %394 = vperm.xlu0 %393, %v335
        %v395 = vpop.permute.xlu0 %394
        %398 = vset.pattern.permute.xlu0 0
        %399 = vperm.xlu0 %398, %v336
        %v400 = vpop.permute.xlu0 %399
        %vm402 = vcmask 130048
        %v404 = vsel %vm402, %v311, 0
        %v407 = vsel %vm402, %v312, 0
        %v410 = vsel %vm402, %v313, 0
        %v413 = vsel %vm402, %v314, 0
        %v416 = vsel %vm402, %v315, 0
        %v419 = vsel %vm402, %v316, 0
        %v422 = vsel %vm402, %v317, 0
        %v425 = vsel %vm402, %v318, 0
        %v428 = vsel %vm402, %v319, 0
        %v431 = vsel %vm402, %v320, 0
        %v434 = vsel %vm402, %v321, 0
        %v437 = vsel %vm402, %v322, 0
        %v440 = vsel %vm402, %v323, 0
        %442 = vmatprep.subr.mxu0 0.0
        %443 = vmatpush1.msra.mxu0 0.0
        %444 = vmatprep.subr.mxu0 0.0
        %445 = vmatpush1.msra.mxu0 0.0
        %446 = vmatprep.subr.mxu0 0.0
        %447 = vmatpush1.msra.mxu0 0.0
        %448 = vmatprep.subr.mxu0 0.0
        %449 = vmatpush1.msra.mxu0 0.0
        %450 = vmatprep.subr.mxu0 0.0
        %451 = vmatpush1.msra.mxu0 0.0
        %452 = vmatprep.subr.mxu0 0.0
        %453 = vmatpush1.msra.mxu0 0.0
        %454 = vmatprep.subr.mxu0 0.0
        %455 = vmatpush1.msra.mxu0 0.0
        %456 = vmatprep.subr.mxu0 0.0
        %457 = vmatpush1.msra.mxu0 0.0
        %458 = vmatprep.subr.mxu0 0.0
        %459 = vmatpush1.msra.mxu0 0.0
        %460 = vmatprep.subr.mxu0 0.0
        %461 = vmatpush1.msra.mxu0 0.0
        %462 = vmatprep.subr.mxu0 0.0
        %463 = vmatpush1.msra.mxu0 0.0
        %464 = vmatprep.subr.mxu0 0.0
        %465 = vmatpush1.msra.mxu0 0.0
        %466 = vmatprep.subr.mxu0 0.0
        %467 = vmatpush1.msra.mxu0 0.0
        %468 = vmatprep.subr.mxu0 0.0
        %469 = vmatpush1.msra.mxu0 0.0
        %470 = vmatprep.subr.mxu0 %v310
        %471 = vmatpush1.msra.mxu0 %v309
        %472 = vmatprep.subr.mxu0 %v308
        %473 = vmatpush1.msra.mxu0 %v307
        %474 = vmatprep.subr.mxu0 0.0
        %475 = vmatpush2.msra.mxu0 0.0
        %476 = vmatprep.subr.mxu0 0.0
        %477 = vmatpush2.msra.mxu0 0.0
        %478 = vmatprep.subr.mxu0 0.0
        %479 = vmatpush2.msra.mxu0 0.0
        %480 = vmatprep.subr.mxu0 0.0
        %481 = vmatpush2.msra.mxu0 0.0
        %482 = vmatprep.subr.mxu0 0.0
        %483 = vmatpush2.msra.mxu0 0.0
        %484 = vmatprep.subr.mxu0 0.0
        %485 = vmatpush2.msra.mxu0 0.0
        %486 = vmatprep.subr.mxu0 0.0
        %487 = vmatpush2.msra.mxu0 0.0
        %488 = vmatprep.subr.mxu0 0.0
        %489 = vmatpush2.msra.mxu0 0.0
        %490 = vmatprep.subr.mxu0 0.0
        %491 = vmatpush2.msra.mxu0 0.0
        %492 = vmatprep.subr.mxu0 0.0
        %493 = vmatpush2.msra.mxu0 0.0
        %494 = vmatprep.subr.mxu0 0.0
        %495 = vmatpush2.msra.mxu0 0.0
        %496 = vmatprep.subr.mxu0 0.0
        %497 = vmatpush2.msra.mxu0 0.0
        %498 = vmatprep.subr.mxu0 0.0
        %499 = vmatpush2.msra.mxu0 0.0
        %500 = vmatprep.subr.mxu0 0.0
        %501 = vmatpush2.msra.mxu0 0.0
        %502 = vmatprep.subr.mxu0 0.0
        %503 = vmatpush2.msra.mxu0 0.0
        %504 = vmatprep.subr.mxu0 0.0
        %505 = vmatpush2.msra.mxu0 0.0
        %506 = vmatprep.mubr.f32.mxu0 0.0
        %507 = vmatmul.mubr.f32.gmra.mxu0 %v404
        %v508 = vpop.f32.mrf.mxu0
        %v509 = vadd.f32 %v340, %v508
        %v510 = vpop.f32.mrf.mxu0
        %v511 = vadd.f32 %v340, %v510
        %512 = vmatprep.mubr.f32.mxu0 0.0
        %513 = vmatmul.mubr.f32.gmra.mxu0 %v407
        %v514 = vpop.f32.mrf.mxu0
        %v515 = vadd.f32 %v345, %v514
        %v516 = vpop.f32.mrf.mxu0
        %v517 = vadd.f32 %v345, %v516
        %518 = vmatprep.mubr.f32.mxu0 0.0
        %519 = vmatmul.mubr.f32.gmra.mxu0 %v410
        %v520 = vpop.f32.mrf.mxu0
        %v521 = vadd.f32 %v350, %v520
        %v522 = vpop.f32.mrf.mxu0
        %v523 = vadd.f32 %v350, %v522
        %524 = vmatprep.mubr.f32.mxu0 0.0
        %525 = vmatmul.mubr.f32.gmra.mxu0 %v413
        %v526 = vpop.f32.mrf.mxu0
        %v527 = vadd.f32 %v355, %v526
        %v528 = vpop.f32.mrf.mxu0
        %v529 = vadd.f32 %v355, %v528
        %530 = vmatprep.mubr.f32.mxu0 0.0
        %531 = vmatmul.mubr.f32.gmra.mxu0 %v416
        %v532 = vpop.f32.mrf.mxu0
        %v533 = vadd.f32 %v360, %v532
        %v534 = vpop.f32.mrf.mxu0
        %v535 = vadd.f32 %v360, %v534
        %536 = vmatprep.mubr.f32.mxu0 0.0
        %537 = vmatmul.mubr.f32.gmra.mxu0 %v419
        %v538 = vpop.f32.mrf.mxu0
        %v539 = vadd.f32 %v365, %v538
        %v540 = vpop.f32.mrf.mxu0
        %v541 = vadd.f32 %v365, %v540
        %542 = vmatprep.mubr.f32.mxu0 0.0
        %543 = vmatmul.mubr.f32.gmra.mxu0 %v422
        %v544 = vpop.f32.mrf.mxu0
        %v545 = vadd.f32 %v370, %v544
        %v546 = vpop.f32.mrf.mxu0
        %v547 = vadd.f32 %v370, %v546
        %548 = vmatprep.mubr.f32.mxu0 0.0
        %549 = vmatmul.mubr.f32.gmra.mxu0 %v425
        %v550 = vpop.f32.mrf.mxu0
        %v551 = vadd.f32 %v375, %v550
        %v552 = vpop.f32.mrf.mxu0
        %v553 = vadd.f32 %v375, %v552
        %554 = vmatprep.mubr.f32.mxu0 0.0
        %555 = vmatmul.mubr.f32.gmra.mxu0 %v428
        %v556 = vpop.f32.mrf.mxu0
        %v557 = vadd.f32 %v380, %v556
        %v558 = vpop.f32.mrf.mxu0
        %v559 = vadd.f32 %v380, %v558
        %560 = vmatprep.mubr.f32.mxu0 0.0
        %561 = vmatmul.mubr.f32.gmra.mxu0 %v431
        %v562 = vpop.f32.mrf.mxu0
        %v563 = vadd.f32 %v385, %v562
        %v564 = vpop.f32.mrf.mxu0
        %v565 = vadd.f32 %v385, %v564
        %566 = vmatprep.mubr.f32.mxu0 0.0
        %567 = vmatmul.mubr.f32.gmra.mxu0 %v434
        %v568 = vpop.f32.mrf.mxu0
        %v569 = vadd.f32 %v390, %v568
        %v570 = vpop.f32.mrf.mxu0
        %v571 = vadd.f32 %v390, %v570
        %572 = vmatprep.mubr.f32.mxu0 0.0
        %573 = vmatmul.mubr.f32.gmra.mxu0 %v437
        %v574 = vpop.f32.mrf.mxu0
        %v575 = vadd.f32 %v395, %v574
        %v576 = vpop.f32.mrf.mxu0
        %v577 = vadd.f32 %v395, %v576
        %578 = vmatprep.mubr.f32.mxu0 0.0
        %579 = vmatmul.mubr.f32.gmra.mxu0 %v440
        %v580 = vpop.f32.mrf.mxu0
        %v581 = vadd.f32 %v400, %v580
        %v582 = vpop.f32.mrf.mxu0
        %v583 = vadd.f32 %v400, %v582
        %584 = vdwg.mxu0
        %v585 = vmax.f32 %v509, 0.0
        %v586 = vmax.f32 %v511, 0.0
        %v587 = vmax.f32 %v515, 0.0
        %v588 = vmax.f32 %v517, 0.0
        %v589 = vmax.f32 %v521, 0.0
        %v590 = vmax.f32 %v523, 0.0
        %v591 = vmax.f32 %v527, 0.0
        %v592 = vmax.f32 %v529, 0.0
        %v593 = vmax.f32 %v533, 0.0
        %v594 = vmax.f32 %v535, 0.0
        %v595 = vmax.f32 %v539, 0.0
        %v596 = vmax.f32 %v541, 0.0
        %v597 = vmax.f32 %v545, 0.0
        %v598 = vmax.f32 %v547, 0.0
        %v599 = vmax.f32 %v551, 0.0
        %v600 = vmax.f32 %v553, 0.0
        %v601 = vmax.f32 %v557, 0.0
        %v602 = vmax.f32 %v559, 0.0
        %v603 = vmax.f32 %v563, 0.0
        %v604 = vmax.f32 %v565, 0.0
        %v605 = vmax.f32 %v569, 0.0
        %v606 = vmax.f32 %v571, 0.0
        %v607 = vmax.f32 %v575, 0.0
        %v608 = vmax.f32 %v577, 0.0
        %v609 = vmax.f32 %v581, 0.0
        %v610 = vmax.f32 %v583, 0.0
        %v611 = vld [vmem:[%s3] sm:$0xff]
        %v612 = vld [vmem:[%s3 + $0x8] sm:$0xff]
        %v613 = vld [vmem:[%s3 + $0x10] sm:$0xff]
        %v614 = vld [vmem:[%s3 + $0x18] sm:$0xff]
        %v615 = vld [vmem:[%s3 + $0x20] sm:$0xff]
        %v616 = vld [vmem:[%s3 + $0x28] sm:$0xff]
        %v617 = vld [vmem:[%s3 + $0x30] sm:$0xff]
        %v618 = vld [vmem:[%s3 + $0x38] sm:$0xff]
        %v619 = vld [vmem:[%s3 + $0x40] sm:$0xff]
        %v620 = vld [vmem:[%s3 + $0x48] sm:$0xff]
        %v621 = vld [vmem:[%s3 + $0x50] sm:$0xff]
        %v622 = vld [vmem:[%s3 + $0x58] sm:$0xff]
        %v623 = vld [vmem:[%s3 + $0x60] sm:$0xf]
        %v624 = vld [vmem:[%s4] sm:$0xff]
        %v625 = vld [vmem:[%s4 + $0x8] sm:$0xff]
        %v626 = vld [vmem:[%s4 + $0x10] sm:$0xff]
        %v627 = vld [vmem:[%s4 + $0x18] sm:$0xff]
        %v628 = vld [vmem:[%s4 + $0x20] sm:$0xff]
        %v629 = vld [vmem:[%s4 + $0x28] sm:$0xff]
        %v630 = vld [vmem:[%s4 + $0x30] sm:$0xff]
        %v631 = vld [vmem:[%s4 + $0x38] sm:$0xff]
        %v632 = vld [vmem:[%s4 + $0x40] sm:$0xff]
        %v633 = vld [vmem:[%s4 + $0x48] sm:$0xff]
        %v634 = vld [vmem:[%s4 + $0x50] sm:$0xff]
        %v635 = vld [vmem:[%s4 + $0x58] sm:$0xff]
        %v636 = vld [vmem:[%s4 + $0x60] sm:$0xf]
        %638 = vset.pattern.permute.xlu0 0
        %639 = vperm.xlu0 %638, %v624
        %v640 = vpop.permute.xlu0 %639
        %643 = vset.pattern.permute.xlu0 0
        %644 = vperm.xlu0 %643, %v625
        %v645 = vpop.permute.xlu0 %644
        %648 = vset.pattern.permute.xlu0 0
        %649 = vperm.xlu0 %648, %v626
        %v650 = vpop.permute.xlu0 %649
        %653 = vset.pattern.permute.xlu0 0
        %654 = vperm.xlu0 %653, %v627
        %v655 = vpop.permute.xlu0 %654
        %658 = vset.pattern.permute.xlu0 0
        %659 = vperm.xlu0 %658, %v628
        %v660 = vpop.permute.xlu0 %659
        %663 = vset.pattern.permute.xlu0 0
        %664 = vperm.xlu0 %663, %v629
        %v665 = vpop.permute.xlu0 %664
        %668 = vset.pattern.permute.xlu0 0
        %669 = vperm.xlu0 %668, %v630
        %v670 = vpop.permute.xlu0 %669
        %673 = vset.pattern.permute.xlu0 0
        %674 = vperm.xlu0 %673, %v631
        %v675 = vpop.permute.xlu0 %674
        %678 = vset.pattern.permute.xlu0 0
        %679 = vperm.xlu0 %678, %v632
        %v680 = vpop.permute.xlu0 %679
        %683 = vset.pattern.permute.xlu0 0
        %684 = vperm.xlu0 %683, %v633
        %v685 = vpop.permute.xlu0 %684
        %688 = vset.pattern.permute.xlu0 0
        %689 = vperm.xlu0 %688, %v634
        %v690 = vpop.permute.xlu0 %689
        %693 = vset.pattern.permute.xlu0 0
        %694 = vperm.xlu0 %693, %v635
        %v695 = vpop.permute.xlu0 %694
        %698 = vset.pattern.permute.xlu0 0
        %699 = vperm.xlu0 %698, %v636
        %v700 = vpop.permute.xlu0 %699
        %vm702 = vcmask 818176
        %v704 = vsel %vm702, %v611, 0
        %v707 = vsel %vm702, %v612, 0
        %v710 = vsel %vm702, %v613, 0
        %v713 = vsel %vm702, %v614, 0
        %v716 = vsel %vm702, %v615, 0
        %v719 = vsel %vm702, %v616, 0
        %v722 = vsel %vm702, %v617, 0
        %v725 = vsel %vm702, %v618, 0
        %v728 = vsel %vm702, %v619, 0
        %v731 = vsel %vm702, %v620, 0
        %v734 = vsel %vm702, %v621, 0
        %v737 = vsel %vm702, %v622, 0
        %v740 = vsel %vm702, %v623, 0
        %vm742 = vcmask 1043456
        %v744 = vsel %vm742, %v609, 0
        %v747 = vsel %vm742, %v610, 0
        %749 = vmatprep.subr.mxu0 0.0
        %750 = vmatpush1.msra.mxu0 0.0
        %751 = vmatprep.subr.mxu0 0.0
        %752 = vmatpush1.msra.mxu0 0.0
        %753 = vmatprep.subr.mxu0 0.0
        %754 = vmatpush1.msra.mxu0 0.0
        %755 = vmatprep.subr.mxu0 %v747
        %756 = vmatpush1.msra.mxu0 %v744
        %757 = vmatprep.subr.mxu0 %v608
        %758 = vmatpush1.msra.mxu0 %v607
        %759 = vmatprep.subr.mxu0 %v606
        %760 = vmatpush1.msra.mxu0 %v605
        %761 = vmatprep.subr.mxu0 %v604
        %762 = vmatpush1.msra.mxu0 %v603
        %763 = vmatprep.subr.mxu0 %v602
        %764 = vmatpush1.msra.mxu0 %v601
        %765 = vmatprep.subr.mxu0 %v600
        %766 = vmatpush1.msra.mxu0 %v599
        %767 = vmatprep.subr.mxu0 %v598
        %768 = vmatpush1.msra.mxu0 %v597
        %769 = vmatprep.subr.mxu0 %v596
        %770 = vmatpush1.msra.mxu0 %v595
        %771 = vmatprep.subr.mxu0 %v594
        %772 = vmatpush1.msra.mxu0 %v593
        %773 = vmatprep.subr.mxu0 %v592
        %774 = vmatpush1.msra.mxu0 %v591
        %775 = vmatprep.subr.mxu0 %v590
        %776 = vmatpush1.msra.mxu0 %v589
        %777 = vmatprep.subr.mxu0 %v588
        %778 = vmatpush1.msra.mxu0 %v587
        %779 = vmatprep.subr.mxu0 %v586
        %780 = vmatpush1.msra.mxu0 %v585
        %781 = vmatprep.subr.mxu0 0.0
        %782 = vmatpush2.msra.mxu0 0.0
        %783 = vmatprep.subr.mxu0 0.0
        %784 = vmatpush2.msra.mxu0 0.0
        %785 = vmatprep.subr.mxu0 0.0
        %786 = vmatpush2.msra.mxu0 0.0
        %787 = vmatprep.subr.mxu0 0.0
        %788 = vmatpush2.msra.mxu0 0.0
        %789 = vmatprep.subr.mxu0 0.0
        %790 = vmatpush2.msra.mxu0 0.0
        %791 = vmatprep.subr.mxu0 0.0
        %792 = vmatpush2.msra.mxu0 0.0
        %793 = vmatprep.subr.mxu0 0.0
        %794 = vmatpush2.msra.mxu0 0.0
        %795 = vmatprep.subr.mxu0 0.0
        %796 = vmatpush2.msra.mxu0 0.0
        %797 = vmatprep.subr.mxu0 0.0
        %798 = vmatpush2.msra.mxu0 0.0
        %799 = vmatprep.subr.mxu0 0.0
        %800 = vmatpush2.msra.mxu0 0.0
        %801 = vmatprep.subr.mxu0 0.0
        %802 = vmatpush2.msra.mxu0 0.0
        %803 = vmatprep.subr.mxu0 0.0
        %804 = vmatpush2.msra.mxu0 0.0
        %805 = vmatprep.subr.mxu0 0.0
        %806 = vmatpush2.msra.mxu0 0.0
        %807 = vmatprep.subr.mxu0 0.0
        %808 = vmatpush2.msra.mxu0 0.0
        %809 = vmatprep.subr.mxu0 0.0
        %810 = vmatpush2.msra.mxu0 0.0
        %811 = vmatprep.subr.mxu0 0.0
        %812 = vmatpush2.msra.mxu0 0.0
        %813 = vmatprep.mubr.f32.mxu0 0.0
        %814 = vmatmul.mubr.f32.gmra.mxu0 %v704
        %v815 = vpop.f32.mrf.mxu0
        %v816 = vadd.f32 %v640, %v815
        %v817 = vpop.f32.mrf.mxu0
        %v818 = vadd.f32 %v640, %v817
        %819 = vmatprep.mubr.f32.mxu0 0.0
        %820 = vmatmul.mubr.f32.gmra.mxu0 %v707
        %v821 = vpop.f32.mrf.mxu0
        %v822 = vadd.f32 %v645, %v821
        %v823 = vpop.f32.mrf.mxu0
        %v824 = vadd.f32 %v645, %v823
        %825 = vmatprep.mubr.f32.mxu0 0.0
        %826 = vmatmul.mubr.f32.gmra.mxu0 %v710
        %v827 = vpop.f32.mrf.mxu0
        %v828 = vadd.f32 %v650, %v827
        %v829 = vpop.f32.mrf.mxu0
        %v830 = vadd.f32 %v650, %v829
        %831 = vmatprep.mubr.f32.mxu0 0.0
        %832 = vmatmul.mubr.f32.gmra.mxu0 %v713
        %v833 = vpop.f32.mrf.mxu0
        %v834 = vadd.f32 %v655, %v833
        %v835 = vpop.f32.mrf.mxu0
        %v836 = vadd.f32 %v655, %v835
        %837 = vmatprep.mubr.f32.mxu0 0.0
        %838 = vmatmul.mubr.f32.gmra.mxu0 %v716
        %v839 = vpop.f32.mrf.mxu0
        %v840 = vadd.f32 %v660, %v839
        %v841 = vpop.f32.mrf.mxu0
        %v842 = vadd.f32 %v660, %v841
        %843 = vmatprep.mubr.f32.mxu0 0.0
        %844 = vmatmul.mubr.f32.gmra.mxu0 %v719
        %v845 = vpop.f32.mrf.mxu0
        %v846 = vadd.f32 %v665, %v845
        %v847 = vpop.f32.mrf.mxu0
        %v848 = vadd.f32 %v665, %v847
        %849 = vmatprep.mubr.f32.mxu0 0.0
        %850 = vmatmul.mubr.f32.gmra.mxu0 %v722
        %v851 = vpop.f32.mrf.mxu0
        %v852 = vadd.f32 %v670, %v851
        %v853 = vpop.f32.mrf.mxu0
        %v854 = vadd.f32 %v670, %v853
        %855 = vmatprep.mubr.f32.mxu0 0.0
        %856 = vmatmul.mubr.f32.gmra.mxu0 %v725
        %v857 = vpop.f32.mrf.mxu0
        %v858 = vadd.f32 %v675, %v857
        %v859 = vpop.f32.mrf.mxu0
        %v860 = vadd.f32 %v675, %v859
        %861 = vmatprep.mubr.f32.mxu0 0.0
        %862 = vmatmul.mubr.f32.gmra.mxu0 %v728
        %v863 = vpop.f32.mrf.mxu0
        %v864 = vadd.f32 %v680, %v863
        %v865 = vpop.f32.mrf.mxu0
        %v866 = vadd.f32 %v680, %v865
        %867 = vmatprep.mubr.f32.mxu0 0.0
        %868 = vmatmul.mubr.f32.gmra.mxu0 %v731
        %v869 = vpop.f32.mrf.mxu0
        %v870 = vadd.f32 %v685, %v869
        %v871 = vpop.f32.mrf.mxu0
        %v872 = vadd.f32 %v685, %v871
        %873 = vmatprep.mubr.f32.mxu0 0.0
        %874 = vmatmul.mubr.f32.gmra.mxu0 %v734
        %v875 = vpop.f32.mrf.mxu0
        %v876 = vadd.f32 %v690, %v875
        %v877 = vpop.f32.mrf.mxu0
        %v878 = vadd.f32 %v690, %v877
        %879 = vmatprep.mubr.f32.mxu0 0.0
        %880 = vmatmul.mubr.f32.gmra.mxu0 %v737
        %v881 = vpop.f32.mrf.mxu0
        %v882 = vadd.f32 %v695, %v881
        %v883 = vpop.f32.mrf.mxu0
        %v884 = vadd.f32 %v695, %v883
        %885 = vmatprep.mubr.f32.mxu0 0.0
        %886 = vmatmul.mubr.f32.gmra.mxu0 %v740
        %v887 = vpop.f32.mrf.mxu0
        %v888 = vadd.f32 %v700, %v887
        %v889 = vpop.f32.mrf.mxu0
        %v890 = vadd.f32 %v700, %v889
        %891 = vdwg.mxu0
        %v892 = vmax.f32 %v816, 0.0
        %v893 = vmax.f32 %v818, 0.0
        %v894 = vmax.f32 %v822, 0.0
        %v895 = vmax.f32 %v824, 0.0
        %v896 = vmax.f32 %v828, 0.0
        %v897 = vmax.f32 %v830, 0.0
        %v898 = vmax.f32 %v834, 0.0
        %v899 = vmax.f32 %v836, 0.0
        %v900 = vmax.f32 %v840, 0.0
        %v901 = vmax.f32 %v842, 0.0
        %v902 = vmax.f32 %v846, 0.0
        %v903 = vmax.f32 %v848, 0.0
        %v904 = vmax.f32 %v852, 0.0
        %v905 = vmax.f32 %v854, 0.0
        %v906 = vmax.f32 %v858, 0.0
        %v907 = vmax.f32 %v860, 0.0
        %v908 = vmax.f32 %v864, 0.0
        %v909 = vmax.f32 %v866, 0.0
        %v910 = vmax.f32 %v870, 0.0
        %v911 = vmax.f32 %v872, 0.0
        %v912 = vmax.f32 %v876, 0.0
        %v913 = vmax.f32 %v878, 0.0
        %v914 = vmax.f32 %v882, 0.0
        %v915 = vmax.f32 %v884, 0.0
        %v916 = vmax.f32 %v888, 0.0
        %v917 = vmax.f32 %v890, 0.0
        %v918 = vld [vmem:[%s5] sm:$0xff]
        %v919 = vld [vmem:[%s5 + $0x8] sm:$0xff]
        %v920 = vld [vmem:[%s5 + $0x10] sm:$0xff]
        %v921 = vld [vmem:[%s5 + $0x18] sm:$0xff]
        %v922 = vld [vmem:[%s5 + $0x20] sm:$0xff]
        %v923 = vld [vmem:[%s5 + $0x28] sm:$0xff]
        %v924 = vld [vmem:[%s5 + $0x30] sm:$0xff]
        %v925 = vld [vmem:[%s5 + $0x38] sm:$0xff]
        %v926 = vld [vmem:[%s5 + $0x40] sm:$0xff]
        %v927 = vld [vmem:[%s5 + $0x48] sm:$0xff]
        %v928 = vld [vmem:[%s5 + $0x50] sm:$0xff]
        %v929 = vld [vmem:[%s5 + $0x58] sm:$0xff]
        %v930 = vld [vmem:[%s5 + $0x60] sm:$0xf]
        %932 = vset.pattern.permute.xlu0 0
        %933 = vperm.xlu0 %932, %v918
        %v934 = vpop.permute.xlu0 %933
        %937 = vset.pattern.permute.xlu0 0
        %938 = vperm.xlu0 %937, %v919
        %v939 = vpop.permute.xlu0 %938
        %942 = vset.pattern.permute.xlu0 0
        %943 = vperm.xlu0 %942, %v920
        %v944 = vpop.permute.xlu0 %943
        %947 = vset.pattern.permute.xlu0 0
        %948 = vperm.xlu0 %947, %v921
        %v949 = vpop.permute.xlu0 %948
        %952 = vset.pattern.permute.xlu0 0
        %953 = vperm.xlu0 %952, %v922
        %v954 = vpop.permute.xlu0 %953
        %957 = vset.pattern.permute.xlu0 0
        %958 = vperm.xlu0 %957, %v923
        %v959 = vpop.permute.xlu0 %958
        %962 = vset.pattern.permute.xlu0 0
        %963 = vperm.xlu0 %962, %v924
        %v964 = vpop.permute.xlu0 %963
        %967 = vset.pattern.permute.xlu0 0
        %968 = vperm.xlu0 %967, %v925
        %v969 = vpop.permute.xlu0 %968
        %972 = vset.pattern.permute.xlu0 0
        %973 = vperm.xlu0 %972, %v926
        %v974 = vpop.permute.xlu0 %973
        %977 = vset.pattern.permute.xlu0 0
        %978 = vperm.xlu0 %977, %v927
        %v979 = vpop.permute.xlu0 %978
        %982 = vset.pattern.permute.xlu0 0
        %983 = vperm.xlu0 %982, %v928
        %v984 = vpop.permute.xlu0 %983
        %987 = vset.pattern.permute.xlu0 0
        %988 = vperm.xlu0 %987, %v929
        %v989 = vpop.permute.xlu0 %988
        %992 = vset.pattern.permute.xlu0 0
        %993 = vperm.xlu0 %992, %v930
        %v994 = vpop.permute.xlu0 %993
        %v996 = vmul.f32 %v892, %v934
        %v997 = vmul.f32 %v893, %v934
        %v998 = vmul.f32 %v894, %v939
        %v999 = vmul.f32 %v895, %v939
        %v1000 = vmul.f32 %v896, %v944
        %v1001 = vmul.f32 %v897, %v944
        %v1002 = vmul.f32 %v898, %v949
        %v1003 = vmul.f32 %v899, %v949
        %v1004 = vmul.f32 %v900, %v954
        %v1005 = vmul.f32 %v901, %v954
        %v1006 = vmul.f32 %v902, %v959
        %v1007 = vmul.f32 %v903, %v959
        %v1008 = vmul.f32 %v904, %v964
        %v1009 = vmul.f32 %v905, %v964
        %v1010 = vmul.f32 %v906, %v969
        %v1011 = vmul.f32 %v907, %v969
        %v1012 = vmul.f32 %v908, %v974
        %v1013 = vmul.f32 %v909, %v974
        %v1014 = vmul.f32 %v910, %v979
        %v1015 = vmul.f32 %v911, %v979
        %v1016 = vmul.f32 %v912, %v984
        %v1017 = vmul.f32 %v913, %v984
        %v1018 = vmul.f32 %v914, %v989
        %v1019 = vmul.f32 %v915, %v989
        %v1020 = vmul.f32 %v916, %v994
        %v1021 = vmul.f32 %v917, %v994
        %v1022 = vadd.f32 %v996, %v998
        %v1023 = vadd.f32 %v1022, %v1000
        %v1024 = vadd.f32 %v1023, %v1002
        %v1025 = vadd.f32 %v1024, %v1004
        %v1026 = vadd.f32 %v1025, %v1006
        %v1027 = vadd.f32 %v1026, %v1008
        %v1028 = vadd.f32 %v1027, %v1010
        %v1029 = vadd.f32 %v1028, %v1012
        %v1030 = vadd.f32 %v1029, %v1014
        %v1031 = vadd.f32 %v1030, %v1016
        %v1032 = vadd.f32 %v1031, %v1018
        %v1033 = vsel %vm742, %v1020, 0.0
        %v1034 = vadd.f32 %v1032, %v1033
        %v1035 = vrot.slane %v1034, 4
        %v1036 = vadd.f32 %v1034, %v1035
        %v1037 = vrot.slane %v1036, 2
        %v1038 = vadd.f32 %v1036, %v1037
        %v1039 = vrot.slane %v1038, 1
        %v1040 = vadd.f32 %v1038, %v1039
        %v1041 = vadd.f32 %v997, %v999
        %v1042 = vadd.f32 %v1041, %v1001
        %v1043 = vadd.f32 %v1042, %v1003
        %v1044 = vadd.f32 %v1043, %v1005
        %v1045 = vadd.f32 %v1044, %v1007
        %v1046 = vadd.f32 %v1045, %v1009
        %v1047 = vadd.f32 %v1046, %v1011
        %v1048 = vadd.f32 %v1047, %v1013
        %v1049 = vadd.f32 %v1048, %v1015
        %v1050 = vadd.f32 %v1049, %v1017
        %v1051 = vadd.f32 %v1050, %v1019
        %v1052 = vsel %vm742, %v1021, 0.0
        %v1053 = vadd.f32 %v1051, %v1052
        %v1054 = vrot.slane %v1053, 4
        %v1055 = vadd.f32 %v1053, %v1054
        %v1056 = vrot.slane %v1055, 2
        %v1057 = vadd.f32 %v1055, %v1056
        %v1058 = vrot.slane %v1057, 1
        %v1059 = vadd.f32 %v1057, %v1058
        %v1060 = vld [vmem:[#allocation2] sm:$0x1]
        %1062 = vset.pattern.permute.xlu0 0
        %1063 = vperm.xlu0 %1062, %v1060
        %v1064 = vpop.permute.xlu0 %1063
        %v1066 = vlaneseq
        %v1067 = vshrl.u32 %v1066, 7
        %v1068 = vsub.s32 0, %v1067
        %v1069 = vrot.slane %v1064, %v1068
        %v1070 = vadd.f32 %v1040, %v1069
        %v1071 = vadd.f32 %v1059, %v1069
        %v1072 = vxor.u32 %v1070, 2147483648
        %v1073 = vxor.u32 %v1071, 2147483648
        %v1074 = vmul.f32 %v1072, 1.442695
        %v1075 = vpow.pop %v1074
        %v1076 = vmul.f32 %v1073, 1.442695
        %v1077 = vpow.pop %v1076
        %v1078 = vadd.f32 %v1075, 1.0
        %v1079 = vadd.f32 %v1077, 1.0
        %v1080 = vrcp.pop %v1078
        %v1081 = vmul.f32 1.0, %v1080
        %v1082 = vrcp.pop %v1079
        %v1083 = vmul.f32 1.0, %v1082
        %v1086 = vcombine.low %v1081, %v1083
        %v1088 = vunpack.c.l.s4 1966171168
        %v1089 = vunpack.c.0.s8 %v1088
        %v1090 = vlaneseq
        %v1091 = vshrl.u32 %v1090, 7
        %v1092 = vsub.s32 %v1089, %v1091
        %v1093 = vrot.slane %v1086, %v1092
        %v1095 = vunpack.c.l.s4 1966171168
        %v1096 = vunpack.c.0.s8 %v1095
        %v1097 = vlaneseq
        %v1098 = vshrl.u32 %v1097, 7
        %v1099 = vsub.s32 %v1096, %v1098
        %v1100 = vrot.slane %v1093, %v1099
        %v1102 = vlaneseq
        %vm1103 = vcmp.ge.s32.totalorder %v1102, 0
        %vm1104 = vcmp.lt.s32.totalorder %v1102, 256
        %vm1105 = vmand %vm1103, %vm1104
        %1106 = vst.msk [vmem:[%s304] sm:$0x3] %vm1105, %v1100
        %s1107 = sand.u32 %s183, 1
        %s1108 = scalar_lea.sflag [#allocation5], %s1107
        %s1109 = sand.u32 %s183, 1
        %s1110 = smul.addr %s1109, 2
        %s1111 = scalar_lea.vmem [#allocation4], %s1110
        // Predicated region
        $region72: #{tpu_custom_call.1} parent=66 // pred_check
          %p1112 = pneg %p193
        $region73: #{tpu_custom_call.1} parent=66 // pred_check_branch
          %1114 = sbr.rel (%p1112) target = $region75
        $region74: #{tpu_custom_call.1} parent=66 // pred_region
          %s1115 = smul.u32 2, %s23
          %s1117 = ssub.s32 32, 32
          %1118 = vsyncadd %s1108, %s1117
          %s1119 = smul.addr %s1115, 16
          %s1120 = scalar_lea.hbm %s7, %s1119
          %s1122 = sshll.u32 %s1111, 4
          %s1123 = int_to_ptr.vmem [resolvable:$true] %s1122
          %1125 = dma.vmem_to_hbm [thread:$0]  %s1123, 32, %s1120, %s1108
        $region75: #{tpu_custom_call.1} parent=66 // pred_fallthru
          _
      $region67: #{tpu_custom_call.1} parent=5 // pred_fallthru
        _
      %p1126 = scmp.le.s32.totalorder 2, %s18
      // Predicated region
      $region76: #{tpu_custom_call.1} parent=5 // pred_check
        %p1127 = pneg %p1126
      $region77: #{tpu_custom_call.1} parent=5 // pred_check_branch
        %1129 = sbr.rel (%p1127) target = $region79
      $region78: #{tpu_custom_call.1} parent=5 // pred_region
        %s1130 = ssub.s32 %s18, 2
        // Predicated region
        $region80: #{tpu_custom_call.1} parent=78 // pred_check
          %p1131 = pneg %p199
        $region81: #{tpu_custom_call.1} parent=78 // pred_check_branch
          %1133 = sbr.rel (%p1131) target = $region83
        $region82: #{tpu_custom_call.1} parent=78 // pred_region
          %s1134 = sand.u32 %s184, 1
          %s1135 = scalar_lea.sflag [#allocation5], %s1134
          %s1136 = sand.u32 %s184, 1
          %s1137 = smul.addr %s1136, 2
          %s1138 = scalar_lea.vmem [#allocation4], %s1137
          %1139 = dma.done %s1135, 32
        $region83: #{tpu_custom_call.1} parent=78 // pred_fallthru
          _
      $region79: #{tpu_custom_call.1} parent=5 // pred_fallthru
        _
    $region6: #{tpu_custom_call.1} parent=1 // loop_footer
      %s22 = sadd.s32 1, %s18
    $region7: #{tpu_custom_call.1} parent=1 // loop_footer_branch
      %17 = sbr.rel target = $region3
    $region8: #{tpu_custom_call.1} parent=1 // loop_exit
      _
    %1140 = vsyncpa [#allocation5], 1
    %s1141 = scalar_lea.sflag [#allocation5], 1
    %1142 = vsyncpa %s1141, 1

</llo_original>
